<compile_context>
chip_gen: v6e
topology: v6e:2x2x1
jax: 0.10.0
libtpu: 0.0.40
codegen_flags: <defaults>
</compile_context>

<pallas_src>
import functools

import jax
import jax.numpy as jnp
from jax.experimental import pallas as pl
from jax.experimental.pallas import tpu as pltpu


def _round_up(x, m):
    return ((x + m - 1) // m) * m


# ----------------------------------------------------------------------------
# Pass 1: linear (context-offset accumulation) + bias + ReLU + partial BN stats
# ----------------------------------------------------------------------------
def _tdnn_matmul_stats_kernel(x_ref, w_ref, b_ref, h_ref, stats_ref, *,
                              context_size, dilation, tile_l, valid_l):
    # x_ref:    (1, T_pad, D)      -- full (padded) time window for this batch
    # w_ref:    (C, D, O_pad)      -- weight, context-major, lane-dense output
    # b_ref:    (1, O_pad)
    # h_ref:    (1, tile_l, O_pad) -- pre-BN activations for this tile
    # stats_ref:(1, 1, 8, O_pad)   -- row0 = per-feature sum, row1 = sum of sq
    j = pl.program_id(1)
    o_pad = h_ref.shape[-1]
    l0 = pl.multiple_of(j * tile_l, tile_l)

    acc = jnp.zeros((tile_l, o_pad), jnp.float32)
    for c in range(context_size):          # static, unrolled; C small (e.g. 5)
        xs = x_ref[0, pl.ds(l0 + c * dilation, tile_l), :]   # (tile_l, D)
        wc = w_ref[c]                                         # (D, O_pad)
        acc += jnp.dot(xs, wc, preferred_element_type=jnp.float32)

    h = jnp.maximum(acc + b_ref[...], 0.0)
    h_ref[0] = h.astype(h_ref.dtype)

    # Streaming per-feature batch statistics (mask padded rows of the last
    # tile so they do not pollute the BatchNorm statistics).
    rows = l0 + jax.lax.broadcasted_iota(jnp.int32, (tile_l, 1), 0)
    hm = jnp.where(rows < valid_l, h, 0.0)
    s = jnp.sum(hm, axis=0, keepdims=True)           # (1, O_pad)
    sq = jnp.sum(hm * hm, axis=0, keepdims=True)     # (1, O_pad)
    stats_ref[0, 0] = jnp.concatenate(
        [s, sq, jnp.zeros((6, o_pad), jnp.float32)], axis=0)


# ----------------------------------------------------------------------------
# Pass 2: apply BatchNorm as a per-feature affine transform
# ----------------------------------------------------------------------------
def _tdnn_bn_apply_kernel(h_ref, scale_ref, shift_ref, o_ref):
    # h_ref/o_ref: (1, tile_l, O_pad);  scale/shift: (1, O_pad)
    o_ref[0] = (h_ref[0] * scale_ref[...] + shift_ref[...]).astype(o_ref.dtype)


# ----------------------------------------------------------------------------
# Parameter prep (run once, not per forward call): transpose + pad the weight
# so no HBM transpose is emitted per call and the output lane dim is 128-dense.
# ----------------------------------------------------------------------------
def prepare_tdnn_params(weight, bias, gamma, beta, *, context_size, input_dim,
                        lane=128):
    O, K = weight.shape
    C, D = context_size, input_dim
    assert K == C * D
    o_pad = _round_up(O, lane)
    pad_o = o_pad - O
    # torch Linear weight (O, C*D) with unfold ordering (c major, d minor)
    w_cko = jnp.transpose(weight.reshape(O, C, D), (1, 2, 0))   # (C, D, O)
    w_cko = jnp.pad(w_cko, ((0, 0), (0, 0), (0, pad_o)))
    bias_p = jnp.pad(bias, (0, pad_o)).reshape(1, o_pad)
    gamma_p = jnp.pad(gamma, (0, pad_o)).reshape(1, o_pad)
    beta_p = jnp.pad(beta, (0, pad_o)).reshape(1, o_pad)
    return w_cko, bias_p, gamma_p, beta_p


# ----------------------------------------------------------------------------
# Forward wrapper
# ----------------------------------------------------------------------------
def tdnn_forward(x, w_cko, bias_p, gamma_p, beta_p, *, context_size,
                 dilation=1, output_dim=None, eps=1e-5, tile_l_max=512,
                 mxu_dtype=jnp.float32):
    """x: (B, T, D) f32.  w_cko: (C, D, O_pad) from prepare_tdnn_params."""
    B, T, D = x.shape
    C = context_size
    Cw, Dw, o_pad = w_cko.shape
    assert Cw == C and Dw == D
    if output_dim is None:
        output_dim = o_pad

    L = T - dilation * (C - 1)
    assert L > 0
    tile_l = min(tile_l_max, _round_up(L, 8))
    num_l = (L + tile_l - 1) // tile_l
    l_pad = num_l * tile_l
    t_pad = l_pad + dilation * (C - 1)

    # Zero-pad time so every L-tile is full (padded rows are masked out of
    # the BN statistics inside the kernel and stripped from the output).
    x_p = jnp.pad(x, ((0, 0), (0, t_pad - T), (0, 0))).astype(mxu_dtype)
    w = w_cko.astype(mxu_dtype)   # bf16 on v6e/v7x halves weight/x HBM traffic

    kernel1 = functools.partial(
        _tdnn_matmul_stats_kernel,
        context_size=C, dilation=dilation, tile_l=tile_l, valid_l=L)

    bytes_accessed = int(
        x_p.size * x_p.dtype.itemsize + w.size * w.dtype.itemsize
        + bias_p.size * 4 + (B * l_pad * o_pad + B * num_l * 8 * o_pad) * 4)
    ce = pl.CostEstimate(flops=2 * B * l_pad * C * D * o_pad,
                         transcendentals=0, bytes_accessed=bytes_accessed)

    cparams = pltpu.CompilerParams(
        dimension_semantics=("parallel", "parallel"),
        vmem_limit_bytes=32 * 1024 * 1024)

    h, stats = pl.pallas_call(
        kernel1,
        out_shape=(jax.ShapeDtypeStruct((B, l_pad, o_pad), jnp.float32),
                   jax.ShapeDtypeStruct((B, num_l, 8, o_pad), jnp.float32)),
        grid=(B, num_l),
        in_specs=[
            pl.BlockSpec((1, t_pad, D), lambda b, j: (b, 0, 0)),     # x (resident per batch)
            pl.BlockSpec((C, D, o_pad), lambda b, j: (0, 0, 0)),     # weight (resident)
            pl.BlockSpec((1, o_pad), lambda b, j: (0, 0)),           # bias
        ],
        out_specs=(
            pl.BlockSpec((1, tile_l, o_pad), lambda b, j: (b, j, 0)),
            pl.BlockSpec((1, 1, 8, o_pad), lambda b, j: (b, j, 0, 0)),
        ),
        compiler_params=cparams,
        cost_estimate=ce,
    )(x_p, w, bias_p)

    # Finalize batch statistics (tiny (num_tiles, O_pad) -> (O_pad) reduction).
    n = float(B * L)
    sums = jnp.sum(stats[:, :, 0, :], axis=(0, 1)).reshape(1, o_pad)
    sumsq = jnp.sum(stats[:, :, 1, :], axis=(0, 1)).reshape(1, o_pad)
    mean = sums * (1.0 / n)
    # guard against tiny negative values from E[h^2] - mean^2 cancellation
    var = jnp.maximum(sumsq * (1.0 / n) - mean * mean, 0.0)
    inv_std = jax.lax.rsqrt(var + eps)
    scale = gamma_p * inv_std
    shift = beta_p - mean * scale

    out = pl.pallas_call(
        _tdnn_bn_apply_kernel,
        out_shape=jax.ShapeDtypeStruct((B, l_pad, o_pad), jnp.float32),
        grid=(B, num_l),
        in_specs=[
            pl.BlockSpec((1, tile_l, o_pad), lambda b, j: (b, j, 0)),
            pl.BlockSpec((1, o_pad), lambda b, j: (0, 0)),
            pl.BlockSpec((1, o_pad), lambda b, j: (0, 0)),
        ],
        out_specs=pl.BlockSpec((1, tile_l, o_pad), lambda b, j: (b, j, 0)),
        compiler_params=cparams,
    )(h, scale, shift)

    return out[:, :L, :output_dim]


# ----------------------------------------------------------------------------
# Pure-JAX reference (mirrors the PyTorch forward, training-mode BatchNorm)
# ----------------------------------------------------------------------------
def tdnn_reference(x, weight, bias, gamma, beta, *, context_size, dilation=1,
                   eps=1e-5):
    B, T, D = x.shape
    C = context_size
    L = T - dilation * (C - 1)
    x_unf = jnp.concatenate(
        [x[:, c * dilation: c * dilation + L, :] for c in range(C)], axis=-1)
    h = jnp.einsum("blk,ok->blo", x_unf, weight) + bias
    h = jnp.maximum(h, 0.0)
    mean = jnp.mean(h, axis=(0, 1), keepdims=True)
    var = jnp.mean((h - mean) ** 2, axis=(0, 1), keepdims=True)
    return gamma * (h - mean) * jax.lax.rsqrt(var + eps) + beta


if __name__ == "__main__":
    # Small, deterministic configuration.
    B, T = 2, 32
    input_dim = 23          # module default
    output_dim = 64         # small hidden size (padded to 128 internally)
    context_size = 5        # module default
    dilation = 1

    key = jax.random.PRNGKey(0)
    kx, kw, kb = jax.random.split(key, 3)

    x = jax.random.normal(kx, (B, T, input_dim), dtype=jnp.float32)

    # nn.Linear(input_dim*context_size, output_dim): uniform(-1/sqrt(K), 1/sqrt(K))
    K = input_dim * context_size
    bound = 1.0 / float(K) ** 0.5
    weight = jax.random.uniform(kw, (output_dim, K), jnp.float32, -bound, bound)
    bias = jax.random.uniform(kb, (output_dim,), jnp.float32, -bound, bound)

    # BatchNorm1d default init: weight (gamma) = 1, bias (beta) = 0.
    gamma = jnp.ones((output_dim,), jnp.float32)
    beta = jnp.zeros((output_dim,), jnp.float32)

    # One-time parameter prep (transpose + lane padding).
    params = prepare_tdnn_params(weight, bias, gamma, beta,
                                 context_size=context_size,
                                 input_dim=input_dim)

    ref = tdnn_reference(x, weight, bias, gamma, beta,
                         context_size=context_size, dilation=dilation)
    L = T - dilation * (context_size - 1)

    # f32 MXU path: bit-for-bit-class agreement with the f32 reference.
    fwd_f32 = jax.jit(functools.partial(
        tdnn_forward, context_size=context_size, dilation=dilation,
        output_dim=output_dim, mxu_dtype=jnp.float32))
    out = jax.block_until_ready(fwd_f32(x, *params))
    assert out.shape == (B, L, output_dim)
    assert jnp.allclose(out, ref, atol=1e-4, rtol=1e-4), "f32 mismatch vs reference"

    # bf16 MXU path (v6e/v7x 256-wide bf16 MXU); f32 accumulation & BN math.
    fwd_bf16 = jax.jit(functools.partial(
        tdnn_forward, context_size=context_size, dilation=dilation,
        output_dim=output_dim, mxu_dtype=jnp.bfloat16))
    out_bf = jax.block_until_ready(fwd_bf16(x, *params))
    assert out_bf.shape == (B, L, output_dim)
    assert jnp.allclose(out_bf, ref, atol=1e-1, rtol=1e-1), "bf16 sanity check failed"

    print("KERNEL_OK")
</pallas_src>

<mosaic_0001>
module attributes {stable_mosaic.version = 11 : i64} {
  func.func @_tdnn_matmul_stats_kernel(%arg0: i32, %arg1: i32, %arg2: memref<1x36x23xf32, #tpu.memory_space<vmem>>, %arg3: memref<5x23x128xf32, #tpu.memory_space<vmem>>, %arg4: memref<1x128xf32, #tpu.memory_space<vmem>>, %arg5: memref<1x32x128xf32, #tpu.memory_space<vmem>>, %arg6: memref<1x1x8x128xf32, #tpu.memory_space<vmem>>) attributes {dimension_semantics = [#tpu.dimension_semantics<parallel>, #tpu.dimension_semantics<parallel>], iteration_bounds = array<i64: 2, 1>, scalar_prefetch = 0 : i64, scratch_operands = 0 : i64, tpu.core_type = #tpu.core_type<tc>, window_params = [{transform_indices = @transform_0, window_bounds = array<i64: 1, 36, 23>}, {pipeline_mode = #tpu.pipeline_mode<synchronous>, transform_indices = @transform_1, window_bounds = array<i64: 5, 23, 128>}, {pipeline_mode = #tpu.pipeline_mode<synchronous>, transform_indices = @transform_2, window_bounds = array<i64: 1, 128>}, {transform_indices = @transform_3, window_bounds = array<i64: 1, 32, 128>}, {transform_indices = @transform_4, window_bounds = array<i64: 1, 1, 8, 128>}]} {
    %c32_i32 = arith.constant 32 : i32
    %0 = arith.muli %arg1, %c32_i32 : i32
    %1 = tpu.assume_multiple %0, 32 : i32
    %cst = arith.constant 0.000000e+00 : f32
    %2 = vector.broadcast %cst : f32 to vector<32x128xf32>
    %c0_i32 = arith.constant 0 : i32
    %3 = arith.addi %1, %c0_i32 : i32
    %c0 = arith.constant 0 : index
    %4 = arith.index_cast %3 : i32 to index
    %c0_0 = arith.constant 0 : index
    %5 = vector.load %arg2[%c0, %4, %c0_0] : memref<1x36x23xf32, #tpu.memory_space<vmem>>, vector<1x32x23xf32>
    %6 = vector.shape_cast %5 : vector<1x32x23xf32> to vector<32x23xf32>
    %c0_1 = arith.constant 0 : index
    %c0_2 = arith.constant 0 : index
    %c0_3 = arith.constant 0 : index
    %7 = vector.load %arg3[%c0_1, %c0_2, %c0_3] : memref<5x23x128xf32, #tpu.memory_space<vmem>>, vector<1x23x128xf32>
    %8 = vector.shape_cast %7 : vector<1x23x128xf32> to vector<23x128xf32>
    %cst_4 = arith.constant dense<0.000000e+00> : vector<32x128xf32>
    %9 = tpu.matmul %6, %8, %cst_4 {dimension_numbers = #tpu.dot_dimension_numbers<[1], [0], [0], [1], [0, 0, 1, 1], [], []>} : vector<32x23xf32>, vector<23x128xf32>, vector<32x128xf32> -> vector<32x128xf32>
    %10 = arith.addf %2, %9 : vector<32x128xf32>
    %c1_i32 = arith.constant 1 : i32
    %11 = arith.addi %1, %c1_i32 : i32
    %c0_5 = arith.constant 0 : index
    %12 = arith.index_cast %11 : i32 to index
    %c0_6 = arith.constant 0 : index
    %13 = vector.load %arg2[%c0_5, %12, %c0_6] : memref<1x36x23xf32, #tpu.memory_space<vmem>>, vector<1x32x23xf32>
    %14 = vector.shape_cast %13 : vector<1x32x23xf32> to vector<32x23xf32>
    %c1 = arith.constant 1 : index
    %c0_7 = arith.constant 0 : index
    %c0_8 = arith.constant 0 : index
    %15 = vector.load %arg3[%c1, %c0_7, %c0_8] : memref<5x23x128xf32, #tpu.memory_space<vmem>>, vector<1x23x128xf32>
    %16 = vector.shape_cast %15 : vector<1x23x128xf32> to vector<23x128xf32>
    %cst_9 = arith.constant dense<0.000000e+00> : vector<32x128xf32>
    %17 = tpu.matmul %14, %16, %cst_9 {dimension_numbers = #tpu.dot_dimension_numbers<[1], [0], [0], [1], [0, 0, 1, 1], [], []>} : vector<32x23xf32>, vector<23x128xf32>, vector<32x128xf32> -> vector<32x128xf32>
    %18 = arith.addf %10, %17 : vector<32x128xf32>
    %c2_i32 = arith.constant 2 : i32
    %19 = arith.addi %1, %c2_i32 : i32
    %c0_10 = arith.constant 0 : index
    %20 = arith.index_cast %19 : i32 to index
    %c0_11 = arith.constant 0 : index
    %21 = vector.load %arg2[%c0_10, %20, %c0_11] : memref<1x36x23xf32, #tpu.memory_space<vmem>>, vector<1x32x23xf32>
    %22 = vector.shape_cast %21 : vector<1x32x23xf32> to vector<32x23xf32>
    %c2 = arith.constant 2 : index
    %c0_12 = arith.constant 0 : index
    %c0_13 = arith.constant 0 : index
    %23 = vector.load %arg3[%c2, %c0_12, %c0_13] : memref<5x23x128xf32, #tpu.memory_space<vmem>>, vector<1x23x128xf32>
    %24 = vector.shape_cast %23 : vector<1x23x128xf32> to vector<23x128xf32>
    %cst_14 = arith.constant dense<0.000000e+00> : vector<32x128xf32>
    %25 = tpu.matmul %22, %24, %cst_14 {dimension_numbers = #tpu.dot_dimension_numbers<[1], [0], [0], [1], [0, 0, 1, 1], [], []>} : vector<32x23xf32>, vector<23x128xf32>, vector<32x128xf32> -> vector<32x128xf32>
    %26 = arith.addf %18, %25 : vector<32x128xf32>
    %c3_i32 = arith.constant 3 : i32
    %27 = arith.addi %1, %c3_i32 : i32
    %c0_15 = arith.constant 0 : index
    %28 = arith.index_cast %27 : i32 to index
    %c0_16 = arith.constant 0 : index
    %29 = vector.load %arg2[%c0_15, %28, %c0_16] : memref<1x36x23xf32, #tpu.memory_space<vmem>>, vector<1x32x23xf32>
    %30 = vector.shape_cast %29 : vector<1x32x23xf32> to vector<32x23xf32>
    %c3 = arith.constant 3 : index
    %c0_17 = arith.constant 0 : index
    %c0_18 = arith.constant 0 : index
    %31 = vector.load %arg3[%c3, %c0_17, %c0_18] : memref<5x23x128xf32, #tpu.memory_space<vmem>>, vector<1x23x128xf32>
    %32 = vector.shape_cast %31 : vector<1x23x128xf32> to vector<23x128xf32>
    %cst_19 = arith.constant dense<0.000000e+00> : vector<32x128xf32>
    %33 = tpu.matmul %30, %32, %cst_19 {dimension_numbers = #tpu.dot_dimension_numbers<[1], [0], [0], [1], [0, 0, 1, 1], [], []>} : vector<32x23xf32>, vector<23x128xf32>, vector<32x128xf32> -> vector<32x128xf32>
    %34 = arith.addf %26, %33 : vector<32x128xf32>
    %c4_i32 = arith.constant 4 : i32
    %35 = arith.addi %1, %c4_i32 : i32
    %c0_20 = arith.constant 0 : index
    %36 = arith.index_cast %35 : i32 to index
    %c0_21 = arith.constant 0 : index
    %37 = vector.load %arg2[%c0_20, %36, %c0_21] : memref<1x36x23xf32, #tpu.memory_space<vmem>>, vector<1x32x23xf32>
    %38 = vector.shape_cast %37 : vector<1x32x23xf32> to vector<32x23xf32>
    %c4 = arith.constant 4 : index
    %c0_22 = arith.constant 0 : index
    %c0_23 = arith.constant 0 : index
    %39 = vector.load %arg3[%c4, %c0_22, %c0_23] : memref<5x23x128xf32, #tpu.memory_space<vmem>>, vector<1x23x128xf32>
    %40 = vector.shape_cast %39 : vector<1x23x128xf32> to vector<23x128xf32>
    %cst_24 = arith.constant dense<0.000000e+00> : vector<32x128xf32>
    %41 = tpu.matmul %38, %40, %cst_24 {dimension_numbers = #tpu.dot_dimension_numbers<[1], [0], [0], [1], [0, 0, 1, 1], [], []>} : vector<32x23xf32>, vector<23x128xf32>, vector<32x128xf32> -> vector<32x128xf32>
    %42 = arith.addf %34, %41 : vector<32x128xf32>
    %c0_25 = arith.constant 0 : index
    %c0_26 = arith.constant 0 : index
    %43 = vector.load %arg4[%c0_25, %c0_26] : memref<1x128xf32, #tpu.memory_space<vmem>>, vector<1x128xf32>
    %44 = vector.broadcast %43 : vector<1x128xf32> to vector<32x128xf32>
    %45 = arith.addf %42, %44 : vector<32x128xf32>
    %cst_27 = arith.constant 0.000000e+00 : f32
    %46 = vector.broadcast %cst_27 : f32 to vector<32x128xf32>
    %47 = arith.maximumf %45, %46 : vector<32x128xf32>
    %c0_28 = arith.constant 0 : index
    %c0_29 = arith.constant 0 : index
    %c0_30 = arith.constant 0 : index
    %48 = vector.load %arg5[%c0_28, %c0_29, %c0_30] : memref<1x32x128xf32, #tpu.memory_space<vmem>>, vector<1x32x128xf32>
    %49 = vector.shape_cast %48 : vector<1x32x128xf32> to vector<32x128xf32>
    %50 = vector.shape_cast %47 : vector<32x128xf32> to vector<1x32x128xf32>
    tpu.vector_store %arg5[%c0_28, %c0_29, %c0_30], %50 {strides = array<i32>} : memref<1x32x128xf32, #tpu.memory_space<vmem>>, vector<1x32x128xf32>,
    %51 = tpu.iota {dimensions = array<i32: 0>} : vector<32x1xi32>
    %52 = vector.broadcast %1 : i32 to vector<32x1xi32>
    %53 = arith.addi %52, %51 : vector<32x1xi32>
    %c28_i32 = arith.constant 28 : i32
    %54 = vector.broadcast %c28_i32 : i32 to vector<32x1xi32>
    %55 = arith.cmpi slt, %53, %54 : vector<32x1xi32>
    %cst_31 = arith.constant 0.000000e+00 : f32
    %56 = vector.shape_cast %55 : vector<32x1xi1> to vector<32x1xi1>
    %57 = vector.broadcast %56 : vector<32x1xi1> to vector<32x128xi1>
    %58 = vector.broadcast %cst_31 : f32 to vector<32x128xf32>
    %59 = arith.select %57, %47, %58 : vector<32x128xi1>, vector<32x128xf32>
    %cst_32 = arith.constant dense<0.000000e+00> : vector<128xf32>
    %60 = vector.multi_reduction <add>, %59, %cst_32 [0] : vector<32x128xf32> to vector<128xf32>
    %61 = vector.shape_cast %60 : vector<128xf32> to vector<1x128xf32>
    %62 = arith.mulf %59, %59 : vector<32x128xf32>
    %cst_33 = arith.constant dense<0.000000e+00> : vector<128xf32>
    %63 = vector.multi_reduction <add>, %62, %cst_33 [0] : vector<32x128xf32> to vector<128xf32>
    %64 = vector.shape_cast %63 : vector<128xf32> to vector<1x128xf32>
    %cst_34 = arith.constant 0.000000e+00 : f32
    %65 = vector.broadcast %cst_34 : f32 to vector<6x128xf32>
    %66 = tpu.concatenate %61, %64, %65 in 0 : vector<1x128xf32>, vector<1x128xf32>, vector<6x128xf32> -> vector<8x128xf32>
    %c0_35 = arith.constant 0 : index
    %c0_36 = arith.constant 0 : index
    %c0_37 = arith.constant 0 : index
    %c0_38 = arith.constant 0 : index
    %67 = vector.load %arg6[%c0_35, %c0_36, %c0_37, %c0_38] : memref<1x1x8x128xf32, #tpu.memory_space<vmem>>, vector<1x1x8x128xf32>
    %68 = vector.shape_cast %67 : vector<1x1x8x128xf32> to vector<8x128xf32>
    %69 = vector.shape_cast %66 : vector<8x128xf32> to vector<1x1x8x128xf32>
    tpu.vector_store %arg6[%c0_35, %c0_36, %c0_37, %c0_38], %69 {strides = array<i32>} : memref<1x1x8x128xf32, #tpu.memory_space<vmem>>, vector<1x1x8x128xf32>,
    return
  }
  func.func @transform_0(%arg0: i32, %arg1: i32) -> (i32, i32, i32) {
    %c0_i32 = arith.constant 0 : i32
    %c0_i32_0 = arith.constant 0 : i32
    %c0_i32_1 = arith.constant 0 : i32
    return %arg0, %c0_i32, %c0_i32_0 : i32, i32, i32
  }
  func.func @transform_1(%arg0: i32, %arg1: i32) -> (i32, i32, i32) {
    %c0_i32 = arith.constant 0 : i32
    %c0_i32_0 = arith.constant 0 : i32
    %c0_i32_1 = arith.constant 0 : i32
    %c0_i32_2 = arith.constant 0 : i32
    return %c0_i32, %c0_i32_0, %c0_i32_1 : i32, i32, i32
  }
  func.func @transform_2(%arg0: i32, %arg1: i32) -> (i32, i32) {
    %c0_i32 = arith.constant 0 : i32
    %c0_i32_0 = arith.constant 0 : i32
    %c0_i32_1 = arith.constant 0 : i32
    return %c0_i32, %c0_i32_0 : i32, i32
  }
  func.func @transform_3(%arg0: i32, %arg1: i32) -> (i32, i32, i32) {
    %c0_i32 = arith.constant 0 : i32
    %c0_i32_0 = arith.constant 0 : i32
    return %arg0, %arg1, %c0_i32 : i32, i32, i32
  }
  func.func @transform_4(%arg0: i32, %arg1: i32) -> (i32, i32, i32, i32) {
    %c0_i32 = arith.constant 0 : i32
    %c0_i32_0 = arith.constant 0 : i32
    %c0_i32_1 = arith.constant 0 : i32
    return %arg0, %arg1, %c0_i32, %c0_i32_0 : i32, i32, i32, i32
  }
}

module attributes {stable_mosaic.version = 11 : i64} {
  func.func @_tdnn_bn_apply_kernel(%arg0: i32, %arg1: i32, %arg2: memref<1x32x128xf32, #tpu.memory_space<vmem>>, %arg3: memref<1x128xf32, #tpu.memory_space<vmem>>, %arg4: memref<1x128xf32, #tpu.memory_space<vmem>>, %arg5: memref<1x32x128xf32, #tpu.memory_space<vmem>>) attributes {dimension_semantics = [#tpu.dimension_semantics<parallel>, #tpu.dimension_semantics<parallel>], iteration_bounds = array<i64: 2, 1>, scalar_prefetch = 0 : i64, scratch_operands = 0 : i64, tpu.core_type = #tpu.core_type<tc>, window_params = [{transform_indices = @transform_0, window_bounds = array<i64: 1, 32, 128>}, {pipeline_mode = #tpu.pipeline_mode<synchronous>, transform_indices = @transform_1, window_bounds = array<i64: 1, 128>}, {pipeline_mode = #tpu.pipeline_mode<synchronous>, transform_indices = @transform_2, window_bounds = array<i64: 1, 128>}, {transform_indices = @transform_3, window_bounds = array<i64: 1, 32, 128>}]} {
    %c0 = arith.constant 0 : index
    %c0_0 = arith.constant 0 : index
    %c0_1 = arith.constant 0 : index
    %0 = vector.load %arg2[%c0, %c0_0, %c0_1] : memref<1x32x128xf32, #tpu.memory_space<vmem>>, vector<1x32x128xf32>
    %1 = vector.shape_cast %0 : vector<1x32x128xf32> to vector<32x128xf32>
    %c0_2 = arith.constant 0 : index
    %c0_3 = arith.constant 0 : index
    %2 = vector.load %arg3[%c0_2, %c0_3] : memref<1x128xf32, #tpu.memory_space<vmem>>, vector<1x128xf32>
    %3 = vector.broadcast %2 : vector<1x128xf32> to vector<32x128xf32>
    %4 = arith.mulf %1, %3 : vector<32x128xf32>
    %c0_4 = arith.constant 0 : index
    %c0_5 = arith.constant 0 : index
    %5 = vector.load %arg4[%c0_4, %c0_5] : memref<1x128xf32, #tpu.memory_space<vmem>>, vector<1x128xf32>
    %6 = vector.broadcast %5 : vector<1x128xf32> to vector<32x128xf32>
    %7 = arith.addf %4, %6 : vector<32x128xf32>
    %c0_6 = arith.constant 0 : index
    %c0_7 = arith.constant 0 : index
    %c0_8 = arith.constant 0 : index
    %8 = vector.load %arg5[%c0_6, %c0_7, %c0_8] : memref<1x32x128xf32, #tpu.memory_space<vmem>>, vector<1x32x128xf32>
    %9 = vector.shape_cast %8 : vector<1x32x128xf32> to vector<32x128xf32>
    %10 = vector.shape_cast %7 : vector<32x128xf32> to vector<1x32x128xf32>
    tpu.vector_store %arg5[%c0_6, %c0_7, %c0_8], %10 {strides = array<i32>} : memref<1x32x128xf32, #tpu.memory_space<vmem>>, vector<1x32x128xf32>,
    return
  }
  func.func @transform_0(%arg0: i32, %arg1: i32) -> (i32, i32, i32) {
    %c0_i32 = arith.constant 0 : i32
    %c0_i32_0 = arith.constant 0 : i32
    return %arg0, %arg1, %c0_i32 : i32, i32, i32
  }
  func.func @transform_1(%arg0: i32, %arg1: i32) -> (i32, i32) {
    %c0_i32 = arith.constant 0 : i32
    %c0_i32_0 = arith.constant 0 : i32
    %c0_i32_1 = arith.constant 0 : i32
    return %c0_i32, %c0_i32_0 : i32, i32
  }
  func.func @transform_2(%arg0: i32, %arg1: i32) -> (i32, i32) {
    %c0_i32 = arith.constant 0 : i32
    %c0_i32_0 = arith.constant 0 : i32
    %c0_i32_1 = arith.constant 0 : i32
    return %c0_i32, %c0_i32_0 : i32, i32
  }
  func.func @transform_3(%arg0: i32, %arg1: i32) -> (i32, i32, i32) {
    %c0_i32 = arith.constant 0 : i32
    %c0_i32_0 = arith.constant 0 : i32
    return %arg0, %arg1, %c0_i32 : i32, i32, i32
  }
}

</mosaic_0001>

<llo_original>
// kernel: tdnn_forward.3
$region0: #{tdnn_forward.3}
  #allocation0 [shape = 'u32[]', space=smem, size = 0x4, offset = 0x4, fixed_abs, tag = 'smem constant byte address 0x4 - core index']
  #allocation1 [shape = 'u32[144,128]{1,0:T(1,128)}', space=vmem, size = 0x12000, scoped, tag = 'internal scratch']
  %s0 = inlined_call_operand.vmem [shape: f32[2,32,128], index: 0, kind: input, shape index: {}]
  %s1 = inlined_call_operand.vmem [shape: f32[1,128], index: 1, kind: input, shape index: {}]
  %s2 = inlined_call_operand.vmem [shape: f32[1,128], index: 2, kind: input, shape index: {}]
  %s3 = inlined_call_operand.vmem [shape: f32[2,32,128], index: 3, kind: output, shape index: {}]
  %s4 = sld [smem:[#allocation0]]
  $region45: #{tdnn_forward.3} parent=0
    _
  %s6 = ssub.s32 1, %s4
  %s7 = scalar_select 0, %s6, %s4
  loop: start=0, step=1, limit=4
  $region2: #{tdnn_forward.3} parent=0 // loop_pre_header
    _
  $region3: #{tdnn_forward.3} parent=0 // loop_header
    %s9 = sphi 0, %s13
    %p10 = scmp.ge.s32.totalorder %s9, 4
    %s16 = sphi 0, %s28
    %s17 = sphi 0, %s24
    %s18 = sphi 0, %s16
    %s19 = sphi 0, %s17
    %s20 = sphi 0, %s18
    %s21 = sphi 0, %s19
    %s33 = sphi 0, %s35
    %s36 = sphi 0, %s33
    %s37 = sphi 0, %s36
    %s53 = sphi 0, %s37
    %s57 = sphi 0, %s57
    %s59 = sphi 0, %s57
    %s60 = sphi 0, %s59
    %s74 = sphi 0, %s60
    %s78 = sphi 0, %s78
    %s80 = sphi 0, %s78
    %s81 = sphi 0, %s80
    %s95 = sphi 0, %s81
    %s103 = sphi 0, %s105
    %s106 = sphi 0, %s103
    %s107 = sphi 0, %s106
    %s123 = sphi 0, %s107
  $region4: #{tdnn_forward.3} parent=0 // loop_header_branch
    %12 = sbr.rel (%p10) target = $region8
  $region5: #{tdnn_forward.3} parent=0 // loop_body
    %s14 = ssub.s32 %s9, 1
    %s15 = ssub.s32 %s9, 2
    %s22 = sadd.s32 1, %s17
    %p23 = scmp.ge.s32.totalorder %s22, 1
    %s24 = scalar_select %p23, 0, %s22
    %s25 = sadd.s32 1, %s16
    %s26 = scalar_select %p23, %s25, %s16
    %p27 = scmp.ge.s32.totalorder %s26, 2
    %s28 = scalar_select %p27, 0, %s26
    %s29 = ssub.s32 %s16, %s28
    %s30 = ssub.s32 %s17, %s24
    %s31 = sor.u32 %s29, %s30
    %p32 = scmp.eq.s32.totalorder %s31, 0
    %s34 = sadd.s32 %s33, 1
    %s35 = scalar_select %p32, %s33, %s34
    %p38 = pneg %p32
    %p39 = scmp.eq.s32.totalorder %s9, 1
    %p40 = por %p38, %p39
    %p41 = scmp.ne.s32.totalorder %s33, %s36
    %p42 = scmp.eq.s32.totalorder %s9, 0
    %p43 = por %p41, %p42
    %p44 = scmp.ne.s32.totalorder %s33, %s36
    %p45 = scmp.eq.s32.totalorder %s14, 1
    %p46 = por %p44, %p45
    %p47 = scmp.ne.s32.totalorder %s36, %s37
    %p48 = scmp.eq.s32.totalorder %s14, 0
    %p49 = por %p47, %p48
    %p50 = scmp.ne.s32.totalorder %s36, %s37
    %p51 = scmp.eq.s32.totalorder %s15, 1
    %p52 = por %p50, %p51
    %p54 = scmp.ne.s32.totalorder %s37, %s53
    %p55 = scmp.eq.s32.totalorder %s15, 0
    %p56 = por %p54, %p55
    %s58 = sadd.s32 %s57, 1
    %p61 = scmp.eq.s32.totalorder %s9, 1
    %p62 = scmp.ne.s32.totalorder %s57, %s59
    %p63 = scmp.eq.s32.totalorder %s9, 0
    %p64 = por %p62, %p63
    %p65 = scmp.ne.s32.totalorder %s57, %s59
    %p66 = scmp.eq.s32.totalorder %s14, 1
    %p67 = por %p65, %p66
    %p68 = scmp.ne.s32.totalorder %s59, %s60
    %p69 = scmp.eq.s32.totalorder %s14, 0
    %p70 = por %p68, %p69
    %p71 = scmp.ne.s32.totalorder %s59, %s60
    %p72 = scmp.eq.s32.totalorder %s15, 1
    %p73 = por %p71, %p72
    %p75 = scmp.ne.s32.totalorder %s60, %s74
    %p76 = scmp.eq.s32.totalorder %s15, 0
    %p77 = por %p75, %p76
    %s79 = sadd.s32 %s78, 1
    %p82 = scmp.eq.s32.totalorder %s9, 1
    %p83 = scmp.ne.s32.totalorder %s78, %s80
    %p84 = scmp.eq.s32.totalorder %s9, 0
    %p85 = por %p83, %p84
    %p86 = scmp.ne.s32.totalorder %s78, %s80
    %p87 = scmp.eq.s32.totalorder %s14, 1
    %p88 = por %p86, %p87
    %p89 = scmp.ne.s32.totalorder %s80, %s81
    %p90 = scmp.eq.s32.totalorder %s14, 0
    %p91 = por %p89, %p90
    %p92 = scmp.ne.s32.totalorder %s80, %s81
    %p93 = scmp.eq.s32.totalorder %s15, 1
    %p94 = por %p92, %p93
    %p96 = scmp.ne.s32.totalorder %s81, %s95
    %p97 = scmp.eq.s32.totalorder %s15, 0
    %p98 = por %p96, %p97
    %s99 = ssub.s32 %s16, %s28
    %s100 = ssub.s32 %s17, %s24
    %s101 = sor.u32 %s99, %s100
    %p102 = scmp.eq.s32.totalorder %s101, 0
    %s104 = sadd.s32 %s103, 1
    %s105 = scalar_select %p102, %s103, %s104
    %p108 = pneg %p102
    %p109 = scmp.eq.s32.totalorder %s9, 1
    %p110 = por %p108, %p109
    %p111 = scmp.ne.s32.totalorder %s103, %s106
    %p112 = scmp.eq.s32.totalorder %s9, 0
    %p113 = por %p111, %p112
    %p114 = scmp.ne.s32.totalorder %s103, %s106
    %p115 = scmp.eq.s32.totalorder %s14, 1
    %p116 = por %p114, %p115
    %p117 = scmp.ne.s32.totalorder %s106, %s107
    %p118 = scmp.eq.s32.totalorder %s14, 0
    %p119 = por %p117, %p118
    %p120 = scmp.ne.s32.totalorder %s106, %s107
    %p121 = scmp.eq.s32.totalorder %s15, 1
    %p122 = por %p120, %p121
    %p124 = scmp.ne.s32.totalorder %s107, %s123
    %p125 = scmp.eq.s32.totalorder %s15, 0
    %p126 = por %p124, %p125
    %p127 = scmp.le.s32.totalorder 1, %s9
    %p128 = scmp.lt.s32.totalorder %s9, 3
    %p129 = pnand %p127, %p128
    %p130 = pneg %p129
    // Predicated region
    $region9: #{tdnn_forward.3} parent=5 // pred_check
      _
    $region10: #{tdnn_forward.3} parent=5 // pred_check_branch
      %132 = sbr.rel (%p129) target = $region12
    $region11: #{tdnn_forward.3} parent=5 // pred_region
      %s133 = ssub.s32 %s9, 1
      // Predicated region
      $region13: #{tdnn_forward.3} parent=11 // pred_check
        %p134 = pneg %p70
      $region14: #{tdnn_forward.3} parent=11 // pred_check_branch
        %136 = sbr.rel (%p134) target = $region16
      $region15: #{tdnn_forward.3} parent=11 // pred_region
        _
      $region16: #{tdnn_forward.3} parent=11 // pred_fallthru
        _
      // Predicated region
      $region17: #{tdnn_forward.3} parent=11 // pred_check
        %p137 = pneg %p91
      $region18: #{tdnn_forward.3} parent=11 // pred_check_branch
        %139 = sbr.rel (%p137) target = $region20
      $region19: #{tdnn_forward.3} parent=11 // pred_region
        _
      $region20: #{tdnn_forward.3} parent=11 // pred_fallthru
        _
    $region12: #{tdnn_forward.3} parent=5 // pred_fallthru
      _
    %p140 = scmp.lt.s32.totalorder %s9, 2
    // Predicated region
    $region21: #{tdnn_forward.3} parent=5 // pred_check
      %p141 = pneg %p140
    $region22: #{tdnn_forward.3} parent=5 // pred_check_branch
      %143 = sbr.rel (%p141) target = $region24
    $region23: #{tdnn_forward.3} parent=5 // pred_region
      // Predicated region
      $region25: #{tdnn_forward.3} parent=23 // pred_check
        %p144 = pneg %p43
      $region26: #{tdnn_forward.3} parent=23 // pred_check_branch
        %146 = sbr.rel (%p144) target = $region28
      $region27: #{tdnn_forward.3} parent=23 // pred_region
        %s147 = smul.u32 4, %s17
        %p148 = scmp.lt.s32.totalorder %s16, 1
        %s149 = scalar_select %p148, %s16, 1
        %p150 = scmp.lt.s32.totalorder %s147, 3
        %s151 = scalar_select %p150, %s147, 3
        %s152 = smul.addr %s149, 4
        %s153 = sadd.s32 %s151, %s152
        %s154 = smul.addr %s153, 8
        %s155 = scalar_lea.vmem %s0, %s154
        %s156 = smul.u32 4, %s17
      $region28: #{tdnn_forward.3} parent=23 // pred_fallthru
        _
    $region24: #{tdnn_forward.3} parent=5 // pred_fallthru
      _
    %p157 = scmp.le.s32.totalorder 1, %s9
    %p158 = scmp.lt.s32.totalorder %s9, 3
    %p159 = pnand %p157, %p158
    %p160 = pneg %p159
    // Predicated region
    $region29: #{tdnn_forward.3} parent=5 // pred_check
      _
    $region30: #{tdnn_forward.3} parent=5 // pred_check_branch
      %162 = sbr.rel (%p159) target = $region32
    $region31: #{tdnn_forward.3} parent=5 // pred_region
      %s163 = ssub.s32 %s9, 1
      %s164 = smul.u32 4, %s19
      %p165 = scmp.lt.s32.totalorder %s18, 1
      %s166 = scalar_select %p165, %s18, 1
      %p167 = scmp.lt.s32.totalorder %s164, 3
      %s168 = scalar_select %p167, %s164, 3
      %s169 = smul.addr %s166, 4
      %s170 = sadd.s32 %s168, %s169
      %s171 = smul.addr %s170, 8
      %s172 = scalar_lea.vmem %s0, %s171
      %p173 = pneg %p49
      %p174 = pneg %p46
      %p175 = pneg %p70
      %p176 = pneg %p67
      %p177 = pneg %p91
      %p178 = pneg %p88
      %p179 = pneg %p119
      %p180 = pneg %p116
      %s181 = smul.u32 4, %s19
      %p182 = scmp.lt.s32.totalorder %s18, 1
      %s183 = scalar_select %p182, %s18, 1
      %p184 = scmp.lt.s32.totalorder %s181, 3
      %s185 = scalar_select %p184, %s181, 3
      %s186 = smul.addr %s183, 4
      %s187 = sadd.s32 %s185, %s186
      %s188 = smul.addr %s187, 8
      %s189 = scalar_lea.vmem %s3, %s188
      %s190 = smul.u32 4, %s19
      %p191 = scmp.lt.s32.totalorder %s18, 1
      %s192 = scalar_select %p191, %s18, 1
      %p193 = scmp.lt.s32.totalorder %s190, 3
      %s194 = scalar_select %p193, %s190, 3
      %s195 = smul.addr %s192, 4
      %s196 = sadd.s32 %s194, %s195
      %s197 = smul.addr %s196, 8
      %s198 = scalar_lea.vmem %s0, %s197
      %s199 = smul.u32 4, %s19
      %s200 = smul.u32 4, %s19
      %p201 = scmp.lt.s32.totalorder %s18, 1
      %s202 = scalar_select %p201, %s18, 1
      %p203 = scmp.lt.s32.totalorder %s200, 3
      %s204 = scalar_select %p203, %s200, 3
      %s205 = smul.addr %s202, 4
      %s206 = sadd.s32 %s204, %s205
      %s207 = smul.addr %s206, 8
      %s208 = scalar_lea.vmem %s3, %s207
      %s209 = smul.u32 4, %s19
      %v210 = vld [vmem:[%s198] sm:$0xff]
      %v211 = vld [vmem:[%s198 + $0x8] sm:$0xff]
      %v212 = vld [vmem:[%s198 + $0x10] sm:$0xff]
      %v213 = vld [vmem:[%s198 + $0x18] sm:$0xff]
      %v214 = vld [vmem:[%s1] sm:$0x1]
      %v216 = vlaneseq
      %v217 = vshrl.u32 %v216, 7
      %v218 = vsub.s32 0, %v217
      %v219 = vrot.slane %v214, %v218
      %v221 = vmul.f32 %v210, %v219
      %v222 = vmul.f32 %v211, %v219
      %v223 = vmul.f32 %v212, %v219
      %v224 = vmul.f32 %v213, %v219
      %v225 = vld [vmem:[%s2] sm:$0x1]
      %v227 = vlaneseq
      %v228 = vshrl.u32 %v227, 7
      %v229 = vsub.s32 0, %v228
      %v230 = vrot.slane %v225, %v229
      %v232 = vadd.f32 %v221, %v230
      %v233 = vadd.f32 %v222, %v230
      %v234 = vadd.f32 %v223, %v230
      %v235 = vadd.f32 %v224, %v230
      %236 = vst [vmem:[%s208] sm:$0xff] %v232
      %237 = vst [vmem:[%s208 + $0x8] sm:$0xff] %v233
      %238 = vst [vmem:[%s208 + $0x10] sm:$0xff] %v234
      %239 = vst [vmem:[%s208 + $0x18] sm:$0xff] %v235
      %s240 = smul.u32 4, %s19
      %p241 = scmp.lt.s32.totalorder %s18, 1
      %s242 = scalar_select %p241, %s18, 1
      %p243 = scmp.lt.s32.totalorder %s240, 3
      %s244 = scalar_select %p243, %s240, 3
      %s245 = smul.addr %s242, 4
      %s246 = sadd.s32 %s244, %s245
      %s247 = smul.addr %s246, 8
      %s248 = scalar_lea.vmem %s3, %s247
      // Predicated region
      $region33: #{tdnn_forward.3} parent=31 // pred_check
        %p249 = pneg %p116
      $region34: #{tdnn_forward.3} parent=31 // pred_check_branch
        %251 = sbr.rel (%p249) target = $region36
      $region35: #{tdnn_forward.3} parent=31 // pred_region
        %s252 = smul.u32 4, %s19
      $region36: #{tdnn_forward.3} parent=31 // pred_fallthru
        _
    $region32: #{tdnn_forward.3} parent=5 // pred_fallthru
      _
    %p253 = scmp.le.s32.totalorder 2, %s9
    // Predicated region
    $region37: #{tdnn_forward.3} parent=5 // pred_check
      %p254 = pneg %p253
    $region38: #{tdnn_forward.3} parent=5 // pred_check_branch
      %256 = sbr.rel (%p254) target = $region40
    $region39: #{tdnn_forward.3} parent=5 // pred_region
      %s257 = ssub.s32 %s9, 2
      // Predicated region
      $region41: #{tdnn_forward.3} parent=39 // pred_check
        %p258 = pneg %p122
      $region42: #{tdnn_forward.3} parent=39 // pred_check_branch
        %260 = sbr.rel (%p258) target = $region44
      $region43: #{tdnn_forward.3} parent=39 // pred_region
        %s261 = smul.u32 4, %s21
        %p262 = scmp.lt.s32.totalorder %s20, 1
        %s263 = scalar_select %p262, %s20, 1
        %p264 = scmp.lt.s32.totalorder %s261, 3
        %s265 = scalar_select %p264, %s261, 3
        %s266 = smul.addr %s263, 4
        %s267 = sadd.s32 %s265, %s266
        %s268 = smul.addr %s267, 8
        %s269 = scalar_lea.vmem %s3, %s268
      $region44: #{tdnn_forward.3} parent=39 // pred_fallthru
        _
    $region40: #{tdnn_forward.3} parent=5 // pred_fallthru
      _
  $region6: #{tdnn_forward.3} parent=0 // loop_footer
    %s13 = sadd.s32 1, %s9
  $region7: #{tdnn_forward.3} parent=0 // loop_footer_branch
    %8 = sbr.rel target = $region3
  $region8: #{tdnn_forward.3} parent=0 // loop_exit
    _

// kernel: tdnn_forward.2
$region0: #{tdnn_forward.2}
  #allocation0 [shape = 'u32[]', space=smem, size = 0x4, offset = 0x4, fixed_abs, tag = 'smem constant byte address 0x4 - core index']
  #allocation1 [shape = 'u32[144,128]{1,0:T(1,128)}', space=vmem, size = 0x12000, scoped, tag = 'internal scratch']
  %s0 = inlined_call_operand.vmem [shape: f32[2,36,23], index: 0, kind: input, shape index: {}]
  %s1 = inlined_call_operand.vmem [shape: f32[5,23,128], index: 1, kind: input, shape index: {}]
  %s2 = inlined_call_operand.vmem [shape: f32[1,128], index: 2, kind: input, shape index: {}]
  %s3 = inlined_call_operand.vmem [shape: f32[2,32,128], index: 3, kind: output, shape index: {0}]
  %s4 = inlined_call_operand.vmem [shape: f32[2,1,8,128], index: 4, kind: output, shape index: {1}]
  %5 = xla_tuple %s3, %s4
  %s6 = sld [smem:[#allocation0]]
  $region53: #{tdnn_forward.2} parent=0
    _
  %s8 = ssub.s32 1, %s6
  %s9 = scalar_select 0, %s8, %s6
  loop: start=0, step=1, limit=4
  $region2: #{tdnn_forward.2} parent=0 // loop_pre_header
    _
  $region3: #{tdnn_forward.2} parent=0 // loop_header
    %s11 = sphi 0, %s15
    %p12 = scmp.ge.s32.totalorder %s11, 4
    %s18 = sphi 0, %s30
    %s19 = sphi 0, %s26
    %s20 = sphi 0, %s18
    %s21 = sphi 0, %s19
    %s22 = sphi 0, %s20
    %s23 = sphi 0, %s21
    %s33 = sphi 0, %s35
    %s36 = sphi 0, %s33
    %s37 = sphi 0, %s36
    %s53 = sphi 0, %s37
    %s57 = sphi 0, %s57
    %s59 = sphi 0, %s57
    %s60 = sphi 0, %s59
    %s74 = sphi 0, %s60
    %s78 = sphi 0, %s78
    %s80 = sphi 0, %s78
    %s81 = sphi 0, %s80
    %s95 = sphi 0, %s81
    %s103 = sphi 0, %s105
    %s106 = sphi 0, %s103
    %s107 = sphi 0, %s106
    %s123 = sphi 0, %s107
    %s131 = sphi 0, %s133
    %s134 = sphi 0, %s131
    %s135 = sphi 0, %s134
    %s151 = sphi 0, %s135
  $region4: #{tdnn_forward.2} parent=0 // loop_header_branch
    %14 = sbr.rel (%p12) target = $region8
  $region5: #{tdnn_forward.2} parent=0 // loop_body
    %s16 = ssub.s32 %s11, 1
    %s17 = ssub.s32 %s11, 2
    %s24 = sadd.s32 1, %s19
    %p25 = scmp.ge.s32.totalorder %s24, 1
    %s26 = scalar_select %p25, 0, %s24
    %s27 = sadd.s32 1, %s18
    %s28 = scalar_select %p25, %s27, %s18
    %p29 = scmp.ge.s32.totalorder %s28, 2
    %s30 = scalar_select %p29, 0, %s28
    %s31 = ssub.s32 %s18, %s30
    %p32 = scmp.eq.s32.totalorder %s31, 0
    %s34 = sadd.s32 %s33, 1
    %s35 = scalar_select %p32, %s33, %s34
    %p38 = pneg %p32
    %p39 = scmp.eq.s32.totalorder %s11, 1
    %p40 = por %p38, %p39
    %p41 = scmp.ne.s32.totalorder %s33, %s36
    %p42 = scmp.eq.s32.totalorder %s11, 0
    %p43 = por %p41, %p42
    %p44 = scmp.ne.s32.totalorder %s33, %s36
    %p45 = scmp.eq.s32.totalorder %s16, 1
    %p46 = por %p44, %p45
    %p47 = scmp.ne.s32.totalorder %s36, %s37
    %p48 = scmp.eq.s32.totalorder %s16, 0
    %p49 = por %p47, %p48
    %p50 = scmp.ne.s32.totalorder %s36, %s37
    %p51 = scmp.eq.s32.totalorder %s17, 1
    %p52 = por %p50, %p51
    %p54 = scmp.ne.s32.totalorder %s37, %s53
    %p55 = scmp.eq.s32.totalorder %s17, 0
    %p56 = por %p54, %p55
    %s58 = sadd.s32 %s57, 1
    %p61 = scmp.eq.s32.totalorder %s11, 1
    %p62 = scmp.ne.s32.totalorder %s57, %s59
    %p63 = scmp.eq.s32.totalorder %s11, 0
    %p64 = por %p62, %p63
    %p65 = scmp.ne.s32.totalorder %s57, %s59
    %p66 = scmp.eq.s32.totalorder %s16, 1
    %p67 = por %p65, %p66
    %p68 = scmp.ne.s32.totalorder %s59, %s60
    %p69 = scmp.eq.s32.totalorder %s16, 0
    %p70 = por %p68, %p69
    %p71 = scmp.ne.s32.totalorder %s59, %s60
    %p72 = scmp.eq.s32.totalorder %s17, 1
    %p73 = por %p71, %p72
    %p75 = scmp.ne.s32.totalorder %s60, %s74
    %p76 = scmp.eq.s32.totalorder %s17, 0
    %p77 = por %p75, %p76
    %s79 = sadd.s32 %s78, 1
    %p82 = scmp.eq.s32.totalorder %s11, 1
    %p83 = scmp.ne.s32.totalorder %s78, %s80
    %p84 = scmp.eq.s32.totalorder %s11, 0
    %p85 = por %p83, %p84
    %p86 = scmp.ne.s32.totalorder %s78, %s80
    %p87 = scmp.eq.s32.totalorder %s16, 1
    %p88 = por %p86, %p87
    %p89 = scmp.ne.s32.totalorder %s80, %s81
    %p90 = scmp.eq.s32.totalorder %s16, 0
    %p91 = por %p89, %p90
    %p92 = scmp.ne.s32.totalorder %s80, %s81
    %p93 = scmp.eq.s32.totalorder %s17, 1
    %p94 = por %p92, %p93
    %p96 = scmp.ne.s32.totalorder %s81, %s95
    %p97 = scmp.eq.s32.totalorder %s17, 0
    %p98 = por %p96, %p97
    %s99 = ssub.s32 %s18, %s30
    %s100 = ssub.s32 %s19, %s26
    %s101 = sor.u32 %s99, %s100
    %p102 = scmp.eq.s32.totalorder %s101, 0
    %s104 = sadd.s32 %s103, 1
    %s105 = scalar_select %p102, %s103, %s104
    %p108 = pneg %p102
    %p109 = scmp.eq.s32.totalorder %s11, 1
    %p110 = por %p108, %p109
    %p111 = scmp.ne.s32.totalorder %s103, %s106
    %p112 = scmp.eq.s32.totalorder %s11, 0
    %p113 = por %p111, %p112
    %p114 = scmp.ne.s32.totalorder %s103, %s106
    %p115 = scmp.eq.s32.totalorder %s16, 1
    %p116 = por %p114, %p115
    %p117 = scmp.ne.s32.totalorder %s106, %s107
    %p118 = scmp.eq.s32.totalorder %s16, 0
    %p119 = por %p117, %p118
    %p120 = scmp.ne.s32.totalorder %s106, %s107
    %p121 = scmp.eq.s32.totalorder %s17, 1
    %p122 = por %p120, %p121
    %p124 = scmp.ne.s32.totalorder %s107, %s123
    %p125 = scmp.eq.s32.totalorder %s17, 0
    %p126 = por %p124, %p125
    %s127 = ssub.s32 %s18, %s30
    %s128 = ssub.s32 %s19, %s26
    %s129 = sor.u32 %s127, %s128
    %p130 = scmp.eq.s32.totalorder %s129, 0
    %s132 = sadd.s32 %s131, 1
    %s133 = scalar_select %p130, %s131, %s132
    %p136 = pneg %p130
    %p137 = scmp.eq.s32.totalorder %s11, 1
    %p138 = por %p136, %p137
    %p139 = scmp.ne.s32.totalorder %s131, %s134
    %p140 = scmp.eq.s32.totalorder %s11, 0
    %p141 = por %p139, %p140
    %p142 = scmp.ne.s32.totalorder %s131, %s134
    %p143 = scmp.eq.s32.totalorder %s16, 1
    %p144 = por %p142, %p143
    %p145 = scmp.ne.s32.totalorder %s134, %s135
    %p146 = scmp.eq.s32.totalorder %s16, 0
    %p147 = por %p145, %p146
    %p148 = scmp.ne.s32.totalorder %s134, %s135
    %p149 = scmp.eq.s32.totalorder %s17, 1
    %p150 = por %p148, %p149
    %p152 = scmp.ne.s32.totalorder %s135, %s151
    %p153 = scmp.eq.s32.totalorder %s17, 0
    %p154 = por %p152, %p153
    %p155 = scmp.le.s32.totalorder 1, %s11
    %p156 = scmp.lt.s32.totalorder %s11, 3
    %p157 = pnand %p155, %p156
    %p158 = pneg %p157
    // Predicated region
    $region9: #{tdnn_forward.2} parent=5 // pred_check
      _
    $region10: #{tdnn_forward.2} parent=5 // pred_check_branch
      %160 = sbr.rel (%p157) target = $region12
    $region11: #{tdnn_forward.2} parent=5 // pred_region
      %s161 = ssub.s32 %s11, 1
      // Predicated region
      $region13: #{tdnn_forward.2} parent=11 // pred_check
        %p162 = pneg %p70
      $region14: #{tdnn_forward.2} parent=11 // pred_check_branch
        %164 = sbr.rel (%p162) target = $region16
      $region15: #{tdnn_forward.2} parent=11 // pred_region
        _
      $region16: #{tdnn_forward.2} parent=11 // pred_fallthru
        _
      // Predicated region
      $region17: #{tdnn_forward.2} parent=11 // pred_check
        %p165 = pneg %p91
      $region18: #{tdnn_forward.2} parent=11 // pred_check_branch
        %167 = sbr.rel (%p165) target = $region20
      $region19: #{tdnn_forward.2} parent=11 // pred_region
        _
      $region20: #{tdnn_forward.2} parent=11 // pred_fallthru
        _
    $region12: #{tdnn_forward.2} parent=5 // pred_fallthru
      _
    %p168 = scmp.lt.s32.totalorder %s11, 2
    // Predicated region
    $region21: #{tdnn_forward.2} parent=5 // pred_check
      %p169 = pneg %p168
    $region22: #{tdnn_forward.2} parent=5 // pred_check_branch
      %171 = sbr.rel (%p169) target = $region24
    $region23: #{tdnn_forward.2} parent=5 // pred_region
      // Predicated region
      $region25: #{tdnn_forward.2} parent=23 // pred_check
        %p172 = pneg %p43
      $region26: #{tdnn_forward.2} parent=23 // pred_check_branch
        %174 = sbr.rel (%p172) target = $region28
      $region27: #{tdnn_forward.2} parent=23 // pred_region
        %p175 = scmp.lt.s32.totalorder %s18, 1
        %s176 = scalar_select %p175, %s18, 1
        %s177 = smul.addr %s176, 5
        %s178 = smul.addr %s177, 8
        %s179 = scalar_lea.vmem %s0, %s178
      $region28: #{tdnn_forward.2} parent=23 // pred_fallthru
        _
    $region24: #{tdnn_forward.2} parent=5 // pred_fallthru
      _
    %p180 = scmp.le.s32.totalorder 1, %s11
    %p181 = scmp.lt.s32.totalorder %s11, 3
    %p182 = pnand %p180, %p181
    %p183 = pneg %p182
    // Predicated region
    $region29: #{tdnn_forward.2} parent=5 // pred_check
      _
    $region30: #{tdnn_forward.2} parent=5 // pred_check_branch
      %185 = sbr.rel (%p182) target = $region32
    $region31: #{tdnn_forward.2} parent=5 // pred_region
      %s186 = ssub.s32 %s11, 1
      %p187 = scmp.lt.s32.totalorder %s20, 1
      %s188 = scalar_select %p187, %s20, 1
      %s189 = smul.addr %s188, 5
      %s190 = smul.addr %s189, 8
      %s191 = scalar_lea.vmem %s0, %s190
      %p192 = pneg %p49
      %p193 = pneg %p46
      %p194 = pneg %p70
      %p195 = pneg %p67
      %p196 = pneg %p91
      %p197 = pneg %p88
      %p198 = pneg %p119
      %p199 = pneg %p116
      %s200 = smul.u32 4, %s21
      %p201 = scmp.lt.s32.totalorder %s20, 1
      %s202 = scalar_select %p201, %s20, 1
      %p203 = scmp.lt.s32.totalorder %s200, 3
      %s204 = scalar_select %p203, %s200, 3
      %s205 = smul.addr %s202, 4
      %s206 = sadd.s32 %s204, %s205
      %s207 = smul.addr %s206, 8
      %s208 = scalar_lea.vmem %s3, %s207
      %p209 = pneg %p147
      %p210 = pneg %p144
      %p211 = scmp.lt.s32.totalorder %s20, 1
      %s212 = scalar_select %p211, %s20, 1
      %p213 = scmp.lt.s32.totalorder %s21, 0
      %s214 = scalar_select %p213, %s21, 0
      %s215 = sadd.s32 %s214, %s212
      %s216 = smul.addr %s215, 8
      %s217 = scalar_lea.vmem %s4, %s216
      %p218 = scmp.lt.s32.totalorder %s20, 1
      %s219 = scalar_select %p218, %s20, 1
      %s220 = smul.addr %s219, 5
      %s221 = smul.addr %s220, 8
      %s222 = scalar_lea.vmem %s0, %s221
      %s223 = smul.u32 4, %s21
      %p224 = scmp.lt.s32.totalorder %s20, 1
      %s225 = scalar_select %p224, %s20, 1
      %p226 = scmp.lt.s32.totalorder %s223, 3
      %s227 = scalar_select %p226, %s223, 3
      %s228 = smul.addr %s225, 4
      %s229 = sadd.s32 %s227, %s228
      %s230 = smul.addr %s229, 8
      %s231 = scalar_lea.vmem %s3, %s230
      %s232 = smul.u32 4, %s21
      %p233 = scmp.lt.s32.totalorder %s20, 1
      %s234 = scalar_select %p233, %s20, 1
      %p235 = scmp.lt.s32.totalorder %s21, 0
      %s236 = scalar_select %p235, %s21, 0
      %s237 = sadd.s32 %s236, %s234
      %s238 = smul.addr %s237, 8
      %s239 = scalar_lea.vmem %s4, %s238
      %s240 = smul.u32 %s21, 32
      %s241 = scalar_lea.vmem %s222, %s240
      %v242 = vld [vmem:[%s241] sm:$0xff]
      %v243 = vld [vmem:[%s241 + $0x8] sm:$0xff]
      %v244 = vld [vmem:[%s241 + $0x10] sm:$0xff]
      %v245 = vld [vmem:[%s241 + $0x18] sm:$0xff]
      %v246 = vld [vmem:[%s1] sm:$0xff]
      %v247 = vld [vmem:[%s1 + $0x8] sm:$0xff]
      %v248 = vld [vmem:[%s1 + $0x10] sm:$0x7f]
      %s249 = sadd.s32 %s240, 1
      %s250 = scalar_lea.vmem %s222, %s249
      %v251 = vld [vmem:[%s250] sm:$0xff]
      %v252 = vld [vmem:[%s250 + $0x8] sm:$0xff]
      %v253 = vld [vmem:[%s250 + $0x10] sm:$0xff]
      %v254 = vld [vmem:[%s250 + $0x18] sm:$0xff]
      %s255 = scalar_lea.vmem %s1, 24
      %v256 = vld [vmem:[%s255] sm:$0xff]
      %v257 = vld [vmem:[%s255 + $0x8] sm:$0xff]
      %v258 = vld [vmem:[%s255 + $0x10] sm:$0x7f]
      %vm259 = vcmask 187392
      %v261 = vsel %vm259, %v251, 0
      %v264 = vsel %vm259, %v252, 0
      %v267 = vsel %vm259, %v253, 0
      %v270 = vsel %vm259, %v254, 0
      %vm272 = vcmask 1046528
      %v274 = vsel %vm272, %v258, 0
      %276 = vmatprep.subr.mxu0 0.0
      %277 = vmatpush1.msra.mxu0 0.0
      %278 = vmatprep.subr.mxu0 0.0
      %279 = vmatpush1.msra.mxu0 0.0
      %280 = vmatprep.subr.mxu0 0.0
      %281 = vmatpush1.msra.mxu0 0.0
      %282 = vmatprep.subr.mxu0 0.0
      %283 = vmatpush1.msra.mxu0 0.0
      %284 = vmatprep.subr.mxu0 0.0
      %285 = vmatpush1.msra.mxu0 0.0
      %286 = vmatprep.subr.mxu0 0.0
      %287 = vmatpush1.msra.mxu0 0.0
      %288 = vmatprep.subr.mxu0 0.0
      %289 = vmatpush1.msra.mxu0 0.0
      %290 = vmatprep.subr.mxu0 0.0
      %291 = vmatpush1.msra.mxu0 0.0
      %292 = vmatprep.subr.mxu0 0.0
      %293 = vmatpush1.msra.mxu0 0.0
      %294 = vmatprep.subr.mxu0 0.0
      %295 = vmatpush1.msra.mxu0 0.0
      %296 = vmatprep.subr.mxu0 0.0
      %297 = vmatpush1.msra.mxu0 0.0
      %298 = vmatprep.subr.mxu0 0.0
      %299 = vmatpush1.msra.mxu0 0.0
      %300 = vmatprep.subr.mxu0 0.0
      %301 = vmatpush1.msra.mxu0 0.0
      %302 = vmatprep.subr.mxu0 0.0
      %303 = vmatpush1.msra.mxu0 %v274
      %304 = vmatprep.subr.mxu0 0.0
      %305 = vmatpush1.msra.mxu0 %v257
      %306 = vmatprep.subr.mxu0 0.0
      %307 = vmatpush1.msra.mxu0 %v256
      %308 = vmatprep.subr.mxu0 0.0
      %309 = vmatpush2.msra.mxu0 0.0
      %310 = vmatprep.subr.mxu0 0.0
      %311 = vmatpush2.msra.mxu0 0.0
      %312 = vmatprep.subr.mxu0 0.0
      %313 = vmatpush2.msra.mxu0 0.0
      %314 = vmatprep.subr.mxu0 0.0
      %315 = vmatpush2.msra.mxu0 0.0
      %316 = vmatprep.subr.mxu0 0.0
      %317 = vmatpush2.msra.mxu0 0.0
      %318 = vmatprep.subr.mxu0 0.0
      %319 = vmatpush2.msra.mxu0 0.0
      %320 = vmatprep.subr.mxu0 0.0
      %321 = vmatpush2.msra.mxu0 0.0
      %322 = vmatprep.subr.mxu0 0.0
      %323 = vmatpush2.msra.mxu0 0.0
      %324 = vmatprep.subr.mxu0 0.0
      %325 = vmatpush2.msra.mxu0 0.0
      %326 = vmatprep.subr.mxu0 0.0
      %327 = vmatpush2.msra.mxu0 0.0
      %328 = vmatprep.subr.mxu0 0.0
      %329 = vmatpush2.msra.mxu0 0.0
      %330 = vmatprep.subr.mxu0 0.0
      %331 = vmatpush2.msra.mxu0 0.0
      %332 = vmatprep.subr.mxu0 0.0
      %333 = vmatpush2.msra.mxu0 0.0
      %334 = vmatprep.subr.mxu0 0.0
      %335 = vmatpush2.msra.mxu0 0.0
      %336 = vmatprep.subr.mxu0 0.0
      %337 = vmatpush2.msra.mxu0 0.0
      %338 = vmatprep.subr.mxu0 0.0
      %339 = vmatpush2.msra.mxu0 0.0
      %340 = vmatprep.mubr.f32.mxu0 0.0
      %341 = vmatmul.mubr.f32.gmra.mxu0 %v261
      %v342 = vpop.f32.mrf.mxu0
      %v343 = vadd.f32 0.0, %v342
      %v344 = vpop.f32.mrf.mxu0
      %345 = vmatprep.mubr.f32.mxu0 0.0
      %346 = vmatmul.mubr.f32.gmra.mxu0 %v264
      %v347 = vpop.f32.mrf.mxu0
      %v348 = vadd.f32 0.0, %v347
      %v349 = vpop.f32.mrf.mxu0
      %350 = vmatprep.mubr.f32.mxu0 0.0
      %351 = vmatmul.mubr.f32.gmra.mxu0 %v267
      %v352 = vpop.f32.mrf.mxu0
      %v353 = vadd.f32 0.0, %v352
      %v354 = vpop.f32.mrf.mxu0
      %355 = vmatprep.mubr.f32.mxu0 0.0
      %356 = vmatmul.mubr.f32.gmra.mxu0 %v270
      %v357 = vpop.f32.mrf.mxu0
      %v358 = vadd.f32 0.0, %v357
      %v359 = vpop.f32.mrf.mxu0
      %360 = vdwg.mxu0
      %v362 = vsel %vm259, %v242, 0
      %v365 = vsel %vm259, %v243, 0
      %v368 = vsel %vm259, %v244, 0
      %v371 = vsel %vm259, %v245, 0
      %v374 = vsel %vm272, %v248, 0
      %376 = vmatprep.subr.mxu0 0.0
      %377 = vmatpush1.msra.mxu0 0.0
      %378 = vmatprep.subr.mxu0 0.0
      %379 = vmatpush1.msra.mxu0 0.0
      %380 = vmatprep.subr.mxu0 0.0
      %381 = vmatpush1.msra.mxu0 0.0
      %382 = vmatprep.subr.mxu0 0.0
      %383 = vmatpush1.msra.mxu0 0.0
      %384 = vmatprep.subr.mxu0 0.0
      %385 = vmatpush1.msra.mxu0 0.0
      %386 = vmatprep.subr.mxu0 0.0
      %387 = vmatpush1.msra.mxu0 0.0
      %388 = vmatprep.subr.mxu0 0.0
      %389 = vmatpush1.msra.mxu0 0.0
      %390 = vmatprep.subr.mxu0 0.0
      %391 = vmatpush1.msra.mxu0 0.0
      %392 = vmatprep.subr.mxu0 0.0
      %393 = vmatpush1.msra.mxu0 0.0
      %394 = vmatprep.subr.mxu0 0.0
      %395 = vmatpush1.msra.mxu0 0.0
      %396 = vmatprep.subr.mxu0 0.0
      %397 = vmatpush1.msra.mxu0 0.0
      %398 = vmatprep.subr.mxu0 0.0
      %399 = vmatpush1.msra.mxu0 0.0
      %400 = vmatprep.subr.mxu0 0.0
      %401 = vmatpush1.msra.mxu0 0.0
      %402 = vmatprep.subr.mxu0 0.0
      %403 = vmatpush1.msra.mxu0 %v374
      %404 = vmatprep.subr.mxu0 0.0
      %405 = vmatpush1.msra.mxu0 %v247
      %406 = vmatprep.subr.mxu0 0.0
      %407 = vmatpush1.msra.mxu0 %v246
      %408 = vmatprep.subr.mxu0 0.0
      %409 = vmatpush2.msra.mxu0 0.0
      %410 = vmatprep.subr.mxu0 0.0
      %411 = vmatpush2.msra.mxu0 0.0
      %412 = vmatprep.subr.mxu0 0.0
      %413 = vmatpush2.msra.mxu0 0.0
      %414 = vmatprep.subr.mxu0 0.0
      %415 = vmatpush2.msra.mxu0 0.0
      %416 = vmatprep.subr.mxu0 0.0
      %417 = vmatpush2.msra.mxu0 0.0
      %418 = vmatprep.subr.mxu0 0.0
      %419 = vmatpush2.msra.mxu0 0.0
      %420 = vmatprep.subr.mxu0 0.0
      %421 = vmatpush2.msra.mxu0 0.0
      %422 = vmatprep.subr.mxu0 0.0
      %423 = vmatpush2.msra.mxu0 0.0
      %424 = vmatprep.subr.mxu0 0.0
      %425 = vmatpush2.msra.mxu0 0.0
      %426 = vmatprep.subr.mxu0 0.0
      %427 = vmatpush2.msra.mxu0 0.0
      %428 = vmatprep.subr.mxu0 0.0
      %429 = vmatpush2.msra.mxu0 0.0
      %430 = vmatprep.subr.mxu0 0.0
      %431 = vmatpush2.msra.mxu0 0.0
      %432 = vmatprep.subr.mxu0 0.0
      %433 = vmatpush2.msra.mxu0 0.0
      %434 = vmatprep.subr.mxu0 0.0
      %435 = vmatpush2.msra.mxu0 0.0
      %436 = vmatprep.subr.mxu0 0.0
      %437 = vmatpush2.msra.mxu0 0.0
      %438 = vmatprep.subr.mxu0 0.0
      %439 = vmatpush2.msra.mxu0 0.0
      %440 = vmatprep.mubr.f32.mxu0 0.0
      %441 = vmatmul.mubr.f32.gmra.mxu0 %v362
      %v442 = vpop.f32.mrf.mxu0
      %v443 = vadd.f32 %v343, %v442
      %v444 = vpop.f32.mrf.mxu0
      %445 = vmatprep.mubr.f32.mxu0 0.0
      %446 = vmatmul.mubr.f32.gmra.mxu0 %v365
      %v447 = vpop.f32.mrf.mxu0
      %v448 = vadd.f32 %v348, %v447
      %v449 = vpop.f32.mrf.mxu0
      %450 = vmatprep.mubr.f32.mxu0 0.0
      %451 = vmatmul.mubr.f32.gmra.mxu0 %v368
      %v452 = vpop.f32.mrf.mxu0
      %v453 = vadd.f32 %v353, %v452
      %v454 = vpop.f32.mrf.mxu0
      %455 = vmatprep.mubr.f32.mxu0 0.0
      %456 = vmatmul.mubr.f32.gmra.mxu0 %v371
      %v457 = vpop.f32.mrf.mxu0
      %v458 = vadd.f32 %v358, %v457
      %v459 = vpop.f32.mrf.mxu0
      %460 = vdwg.mxu0
      %s461 = sadd.s32 %s240, 2
      %s462 = scalar_lea.vmem %s222, %s461
      %v463 = vld [vmem:[%s462] sm:$0xff]
      %v464 = vld [vmem:[%s462 + $0x8] sm:$0xff]
      %v465 = vld [vmem:[%s462 + $0x10] sm:$0xff]
      %v466 = vld [vmem:[%s462 + $0x18] sm:$0xff]
      %s467 = scalar_lea.vmem %s1, 48
      %v468 = vld [vmem:[%s467] sm:$0xff]
      %v469 = vld [vmem:[%s467 + $0x8] sm:$0xff]
      %v470 = vld [vmem:[%s467 + $0x10] sm:$0x7f]
      %v472 = vsel %vm259, %v463, 0
      %v475 = vsel %vm259, %v464, 0
      %v478 = vsel %vm259, %v465, 0
      %v481 = vsel %vm259, %v466, 0
      %v484 = vsel %vm272, %v470, 0
      %486 = vmatprep.subr.mxu0 0.0
      %487 = vmatpush1.msra.mxu0 0.0
      %488 = vmatprep.subr.mxu0 0.0
      %489 = vmatpush1.msra.mxu0 0.0
      %490 = vmatprep.subr.mxu0 0.0
      %491 = vmatpush1.msra.mxu0 0.0
      %492 = vmatprep.subr.mxu0 0.0
      %493 = vmatpush1.msra.mxu0 0.0
      %494 = vmatprep.subr.mxu0 0.0
      %495 = vmatpush1.msra.mxu0 0.0
      %496 = vmatprep.subr.mxu0 0.0
      %497 = vmatpush1.msra.mxu0 0.0
      %498 = vmatprep.subr.mxu0 0.0
      %499 = vmatpush1.msra.mxu0 0.0
      %500 = vmatprep.subr.mxu0 0.0
      %501 = vmatpush1.msra.mxu0 0.0
      %502 = vmatprep.subr.mxu0 0.0
      %503 = vmatpush1.msra.mxu0 0.0
      %504 = vmatprep.subr.mxu0 0.0
      %505 = vmatpush1.msra.mxu0 0.0
      %506 = vmatprep.subr.mxu0 0.0
      %507 = vmatpush1.msra.mxu0 0.0
      %508 = vmatprep.subr.mxu0 0.0
      %509 = vmatpush1.msra.mxu0 0.0
      %510 = vmatprep.subr.mxu0 0.0
      %511 = vmatpush1.msra.mxu0 0.0
      %512 = vmatprep.subr.mxu0 0.0
      %513 = vmatpush1.msra.mxu0 %v484
      %514 = vmatprep.subr.mxu0 0.0
      %515 = vmatpush1.msra.mxu0 %v469
      %516 = vmatprep.subr.mxu0 0.0
      %517 = vmatpush1.msra.mxu0 %v468
      %518 = vmatprep.subr.mxu0 0.0
      %519 = vmatpush2.msra.mxu0 0.0
      %520 = vmatprep.subr.mxu0 0.0
      %521 = vmatpush2.msra.mxu0 0.0
      %522 = vmatprep.subr.mxu0 0.0
      %523 = vmatpush2.msra.mxu0 0.0
      %524 = vmatprep.subr.mxu0 0.0
      %525 = vmatpush2.msra.mxu0 0.0
      %526 = vmatprep.subr.mxu0 0.0
      %527 = vmatpush2.msra.mxu0 0.0
      %528 = vmatprep.subr.mxu0 0.0
      %529 = vmatpush2.msra.mxu0 0.0
      %530 = vmatprep.subr.mxu0 0.0
      %531 = vmatpush2.msra.mxu0 0.0
      %532 = vmatprep.subr.mxu0 0.0
      %533 = vmatpush2.msra.mxu0 0.0
      %534 = vmatprep.subr.mxu0 0.0
      %535 = vmatpush2.msra.mxu0 0.0
      %536 = vmatprep.subr.mxu0 0.0
      %537 = vmatpush2.msra.mxu0 0.0
      %538 = vmatprep.subr.mxu0 0.0
      %539 = vmatpush2.msra.mxu0 0.0
      %540 = vmatprep.subr.mxu0 0.0
      %541 = vmatpush2.msra.mxu0 0.0
      %542 = vmatprep.subr.mxu0 0.0
      %543 = vmatpush2.msra.mxu0 0.0
      %544 = vmatprep.subr.mxu0 0.0
      %545 = vmatpush2.msra.mxu0 0.0
      %546 = vmatprep.subr.mxu0 0.0
      %547 = vmatpush2.msra.mxu0 0.0
      %548 = vmatprep.subr.mxu0 0.0
      %549 = vmatpush2.msra.mxu0 0.0
      %550 = vmatprep.mubr.f32.mxu0 0.0
      %551 = vmatmul.mubr.f32.gmra.mxu0 %v472
      %v552 = vpop.f32.mrf.mxu0
      %v553 = vadd.f32 0.0, %v552
      %v554 = vpop.f32.mrf.mxu0
      %555 = vmatprep.mubr.f32.mxu0 0.0
      %556 = vmatmul.mubr.f32.gmra.mxu0 %v475
      %v557 = vpop.f32.mrf.mxu0
      %v558 = vadd.f32 0.0, %v557
      %v559 = vpop.f32.mrf.mxu0
      %560 = vmatprep.mubr.f32.mxu0 0.0
      %561 = vmatmul.mubr.f32.gmra.mxu0 %v478
      %v562 = vpop.f32.mrf.mxu0
      %v563 = vadd.f32 0.0, %v562
      %v564 = vpop.f32.mrf.mxu0
      %565 = vmatprep.mubr.f32.mxu0 0.0
      %566 = vmatmul.mubr.f32.gmra.mxu0 %v481
      %v567 = vpop.f32.mrf.mxu0
      %v568 = vadd.f32 0.0, %v567
      %v569 = vpop.f32.mrf.mxu0
      %570 = vdwg.mxu0
      %v571 = vadd.f32 %v443, %v553
      %v572 = vadd.f32 %v448, %v558
      %v573 = vadd.f32 %v453, %v563
      %v574 = vadd.f32 %v458, %v568
      %s575 = sadd.s32 %s240, 3
      %s576 = scalar_lea.vmem %s222, %s575
      %v577 = vld [vmem:[%s576] sm:$0xff]
      %v578 = vld [vmem:[%s576 + $0x8] sm:$0xff]
      %v579 = vld [vmem:[%s576 + $0x10] sm:$0xff]
      %v580 = vld [vmem:[%s576 + $0x18] sm:$0xff]
      %s581 = scalar_lea.vmem %s1, 72
      %v582 = vld [vmem:[%s581] sm:$0xff]
      %v583 = vld [vmem:[%s581 + $0x8] sm:$0xff]
      %v584 = vld [vmem:[%s581 + $0x10] sm:$0x7f]
      %v586 = vsel %vm259, %v577, 0
      %v589 = vsel %vm259, %v578, 0
      %v592 = vsel %vm259, %v579, 0
      %v595 = vsel %vm259, %v580, 0
      %v598 = vsel %vm272, %v584, 0
      %600 = vmatprep.subr.mxu0 0.0
      %601 = vmatpush1.msra.mxu0 0.0
      %602 = vmatprep.subr.mxu0 0.0
      %603 = vmatpush1.msra.mxu0 0.0
      %604 = vmatprep.subr.mxu0 0.0
      %605 = vmatpush1.msra.mxu0 0.0
      %606 = vmatprep.subr.mxu0 0.0
      %607 = vmatpush1.msra.mxu0 0.0
      %608 = vmatprep.subr.mxu0 0.0
      %609 = vmatpush1.msra.mxu0 0.0
      %610 = vmatprep.subr.mxu0 0.0
      %611 = vmatpush1.msra.mxu0 0.0
      %612 = vmatprep.subr.mxu0 0.0
      %613 = vmatpush1.msra.mxu0 0.0
      %614 = vmatprep.subr.mxu0 0.0
      %615 = vmatpush1.msra.mxu0 0.0
      %616 = vmatprep.subr.mxu0 0.0
      %617 = vmatpush1.msra.mxu0 0.0
      %618 = vmatprep.subr.mxu0 0.0
      %619 = vmatpush1.msra.mxu0 0.0
      %620 = vmatprep.subr.mxu0 0.0
      %621 = vmatpush1.msra.mxu0 0.0
      %622 = vmatprep.subr.mxu0 0.0
      %623 = vmatpush1.msra.mxu0 0.0
      %624 = vmatprep.subr.mxu0 0.0
      %625 = vmatpush1.msra.mxu0 0.0
      %626 = vmatprep.subr.mxu0 0.0
      %627 = vmatpush1.msra.mxu0 %v598
      %628 = vmatprep.subr.mxu0 0.0
      %629 = vmatpush1.msra.mxu0 %v583
      %630 = vmatprep.subr.mxu0 0.0
      %631 = vmatpush1.msra.mxu0 %v582
      %632 = vmatprep.subr.mxu0 0.0
      %633 = vmatpush2.msra.mxu0 0.0
      %634 = vmatprep.subr.mxu0 0.0
      %635 = vmatpush2.msra.mxu0 0.0
      %636 = vmatprep.subr.mxu0 0.0
      %637 = vmatpush2.msra.mxu0 0.0
      %638 = vmatprep.subr.mxu0 0.0
      %639 = vmatpush2.msra.mxu0 0.0
      %640 = vmatprep.subr.mxu0 0.0
      %641 = vmatpush2.msra.mxu0 0.0
      %642 = vmatprep.subr.mxu0 0.0
      %643 = vmatpush2.msra.mxu0 0.0
      %644 = vmatprep.subr.mxu0 0.0
      %645 = vmatpush2.msra.mxu0 0.0
      %646 = vmatprep.subr.mxu0 0.0
      %647 = vmatpush2.msra.mxu0 0.0
      %648 = vmatprep.subr.mxu0 0.0
      %649 = vmatpush2.msra.mxu0 0.0
      %650 = vmatprep.subr.mxu0 0.0
      %651 = vmatpush2.msra.mxu0 0.0
      %652 = vmatprep.subr.mxu0 0.0
      %653 = vmatpush2.msra.mxu0 0.0
      %654 = vmatprep.subr.mxu0 0.0
      %655 = vmatpush2.msra.mxu0 0.0
      %656 = vmatprep.subr.mxu0 0.0
      %657 = vmatpush2.msra.mxu0 0.0
      %658 = vmatprep.subr.mxu0 0.0
      %659 = vmatpush2.msra.mxu0 0.0
      %660 = vmatprep.subr.mxu0 0.0
      %661 = vmatpush2.msra.mxu0 0.0
      %662 = vmatprep.subr.mxu0 0.0
      %663 = vmatpush2.msra.mxu0 0.0
      %664 = vmatprep.mubr.f32.mxu0 0.0
      %665 = vmatmul.mubr.f32.gmra.mxu0 %v586
      %v666 = vpop.f32.mrf.mxu0
      %v667 = vadd.f32 0.0, %v666
      %v668 = vpop.f32.mrf.mxu0
      %669 = vmatprep.mubr.f32.mxu0 0.0
      %670 = vmatmul.mubr.f32.gmra.mxu0 %v589
      %v671 = vpop.f32.mrf.mxu0
      %v672 = vadd.f32 0.0, %v671
      %v673 = vpop.f32.mrf.mxu0
      %674 = vmatprep.mubr.f32.mxu0 0.0
      %675 = vmatmul.mubr.f32.gmra.mxu0 %v592
      %v676 = vpop.f32.mrf.mxu0
      %v677 = vadd.f32 0.0, %v676
      %v678 = vpop.f32.mrf.mxu0
      %679 = vmatprep.mubr.f32.mxu0 0.0
      %680 = vmatmul.mubr.f32.gmra.mxu0 %v595
      %v681 = vpop.f32.mrf.mxu0
      %v682 = vadd.f32 0.0, %v681
      %v683 = vpop.f32.mrf.mxu0
      %684 = vdwg.mxu0
      %v685 = vadd.f32 %v571, %v667
      %v686 = vadd.f32 %v572, %v672
      %v687 = vadd.f32 %v573, %v677
      %v688 = vadd.f32 %v574, %v682
      %s689 = sadd.s32 %s240, 4
      %s690 = scalar_lea.vmem %s222, %s689
      %v691 = vld [vmem:[%s690] sm:$0xff]
      %v692 = vld [vmem:[%s690 + $0x8] sm:$0xff]
      %v693 = vld [vmem:[%s690 + $0x10] sm:$0xff]
      %v694 = vld [vmem:[%s690 + $0x18] sm:$0xff]
      %s695 = scalar_lea.vmem %s1, 96
      %v696 = vld [vmem:[%s695] sm:$0xff]
      %v697 = vld [vmem:[%s695 + $0x8] sm:$0xff]
      %v698 = vld [vmem:[%s695 + $0x10] sm:$0x7f]
      %v700 = vsel %vm259, %v691, 0
      %v703 = vsel %vm259, %v692, 0
      %v706 = vsel %vm259, %v693, 0
      %v709 = vsel %vm259, %v694, 0
      %v712 = vsel %vm272, %v698, 0
      %714 = vmatprep.subr.mxu0 0.0
      %715 = vmatpush1.msra.mxu0 0.0
      %716 = vmatprep.subr.mxu0 0.0
      %717 = vmatpush1.msra.mxu0 0.0
      %718 = vmatprep.subr.mxu0 0.0
      %719 = vmatpush1.msra.mxu0 0.0
      %720 = vmatprep.subr.mxu0 0.0
      %721 = vmatpush1.msra.mxu0 0.0
      %722 = vmatprep.subr.mxu0 0.0
      %723 = vmatpush1.msra.mxu0 0.0
      %724 = vmatprep.subr.mxu0 0.0
      %725 = vmatpush1.msra.mxu0 0.0
      %726 = vmatprep.subr.mxu0 0.0
      %727 = vmatpush1.msra.mxu0 0.0
      %728 = vmatprep.subr.mxu0 0.0
      %729 = vmatpush1.msra.mxu0 0.0
      %730 = vmatprep.subr.mxu0 0.0
      %731 = vmatpush1.msra.mxu0 0.0
      %732 = vmatprep.subr.mxu0 0.0
      %733 = vmatpush1.msra.mxu0 0.0
      %734 = vmatprep.subr.mxu0 0.0
      %735 = vmatpush1.msra.mxu0 0.0
      %736 = vmatprep.subr.mxu0 0.0
      %737 = vmatpush1.msra.mxu0 0.0
      %738 = vmatprep.subr.mxu0 0.0
      %739 = vmatpush1.msra.mxu0 0.0
      %740 = vmatprep.subr.mxu0 0.0
      %741 = vmatpush1.msra.mxu0 %v712
      %742 = vmatprep.subr.mxu0 0.0
      %743 = vmatpush1.msra.mxu0 %v697
      %744 = vmatprep.subr.mxu0 0.0
      %745 = vmatpush1.msra.mxu0 %v696
      %746 = vmatprep.subr.mxu0 0.0
      %747 = vmatpush2.msra.mxu0 0.0
      %748 = vmatprep.subr.mxu0 0.0
      %749 = vmatpush2.msra.mxu0 0.0
      %750 = vmatprep.subr.mxu0 0.0
      %751 = vmatpush2.msra.mxu0 0.0
      %752 = vmatprep.subr.mxu0 0.0
      %753 = vmatpush2.msra.mxu0 0.0
      %754 = vmatprep.subr.mxu0 0.0
      %755 = vmatpush2.msra.mxu0 0.0
      %756 = vmatprep.subr.mxu0 0.0
      %757 = vmatpush2.msra.mxu0 0.0
      %758 = vmatprep.subr.mxu0 0.0
      %759 = vmatpush2.msra.mxu0 0.0
      %760 = vmatprep.subr.mxu0 0.0
      %761 = vmatpush2.msra.mxu0 0.0
      %762 = vmatprep.subr.mxu0 0.0
      %763 = vmatpush2.msra.mxu0 0.0
      %764 = vmatprep.subr.mxu0 0.0
      %765 = vmatpush2.msra.mxu0 0.0
      %766 = vmatprep.subr.mxu0 0.0
      %767 = vmatpush2.msra.mxu0 0.0
      %768 = vmatprep.subr.mxu0 0.0
      %769 = vmatpush2.msra.mxu0 0.0
      %770 = vmatprep.subr.mxu0 0.0
      %771 = vmatpush2.msra.mxu0 0.0
      %772 = vmatprep.subr.mxu0 0.0
      %773 = vmatpush2.msra.mxu0 0.0
      %774 = vmatprep.subr.mxu0 0.0
      %775 = vmatpush2.msra.mxu0 0.0
      %776 = vmatprep.subr.mxu0 0.0
      %777 = vmatpush2.msra.mxu0 0.0
      %778 = vmatprep.mubr.f32.mxu0 0.0
      %779 = vmatmul.mubr.f32.gmra.mxu0 %v700
      %v780 = vpop.f32.mrf.mxu0
      %v781 = vadd.f32 0.0, %v780
      %v782 = vpop.f32.mrf.mxu0
      %783 = vmatprep.mubr.f32.mxu0 0.0
      %784 = vmatmul.mubr.f32.gmra.mxu0 %v703
      %v785 = vpop.f32.mrf.mxu0
      %v786 = vadd.f32 0.0, %v785
      %v787 = vpop.f32.mrf.mxu0
      %788 = vmatprep.mubr.f32.mxu0 0.0
      %789 = vmatmul.mubr.f32.gmra.mxu0 %v706
      %v790 = vpop.f32.mrf.mxu0
      %v791 = vadd.f32 0.0, %v790
      %v792 = vpop.f32.mrf.mxu0
      %793 = vmatprep.mubr.f32.mxu0 0.0
      %794 = vmatmul.mubr.f32.gmra.mxu0 %v709
      %v795 = vpop.f32.mrf.mxu0
      %v796 = vadd.f32 0.0, %v795
      %v797 = vpop.f32.mrf.mxu0
      %798 = vdwg.mxu0
      %v799 = vadd.f32 %v685, %v781
      %v800 = vadd.f32 %v686, %v786
      %v801 = vadd.f32 %v687, %v791
      %v802 = vadd.f32 %v688, %v796
      %v803 = vld [vmem:[%s2] sm:$0x1]
      %v805 = vlaneseq
      %v806 = vshrl.u32 %v805, 7
      %v807 = vsub.s32 0, %v806
      %v808 = vrot.slane %v803, %v807
      %v810 = vadd.f32 %v799, %v808
      %v811 = vadd.f32 %v800, %v808
      %v812 = vadd.f32 %v801, %v808
      %v813 = vadd.f32 %v802, %v808
      %v814 = vmax.f32 %v810, 0.0
      %v815 = vmax.f32 %v811, 0.0
      %v816 = vmax.f32 %v812, 0.0
      %v817 = vmax.f32 %v813, 0.0
      %818 = vst [vmem:[%s231] sm:$0xff] %v814
      %819 = vst [vmem:[%s231 + $0x8] sm:$0xff] %v815
      %820 = vst [vmem:[%s231 + $0x10] sm:$0xff] %v816
      %821 = vst [vmem:[%s231 + $0x18] sm:$0xff] %v817
      %v822 = vlaneseq
      %v823 = vshrl.u32 %v822, 7
      %v824 = vadd.s32 %v823, 8
      %v825 = vadd.s32 %v823, 16
      %v826 = vadd.s32 %v823, 24
      %v827 = vstv %s240
      %v828 = vadd.s32 %v827, %v823
      %v829 = vadd.s32 %v827, %v824
      %v830 = vadd.s32 %v827, %v825
      %v831 = vadd.s32 %v827, %v826
      %vm832 = vcmp.lt.s32.totalorder %v828, 28
      %vm833 = vcmp.lt.s32.totalorder %v829, 28
      %vm834 = vcmp.lt.s32.totalorder %v830, 28
      %vm835 = vcmp.lt.s32.totalorder %v831, 28
      %v836 = vsel %vm832, 1, 0
      %v837 = vsel %vm833, 1, 0
      %v838 = vsel %vm834, 1, 0
      %v839 = vsel %vm835, 1, 0
      %vm840 = vcmp.eq.s32.totalorder %v836, 1
      %vm841 = vcmp.eq.s32.totalorder %v837, 1
      %vm842 = vcmp.eq.s32.totalorder %v838, 1
      %vm843 = vcmp.eq.s32.totalorder %v839, 1
      %v844 = vsel %vm840, %v814, 0.0
      %v845 = vsel %vm841, %v815, 0.0
      %v846 = vsel %vm842, %v816, 0.0
      %v847 = vsel %vm843, %v817, 0.0
      %v848 = vadd.f32 %v844, %v845
      %v849 = vadd.f32 %v848, %v846
      %v850 = vadd.f32 %v849, %v847
      %v851 = vrot.slane %v850, 4
      %v852 = vadd.f32 %v850, %v851
      %v853 = vrot.slane %v852, 2
      %v854 = vadd.f32 %v852, %v853
      %v855 = vrot.slane %v854, 1
      %v856 = vadd.f32 %v854, %v855
      %v857 = vmul.f32 %v844, %v844
      %v858 = vmul.f32 %v845, %v845
      %v859 = vmul.f32 %v846, %v846
      %v860 = vmul.f32 %v847, %v847
      %v861 = vadd.f32 %v857, %v858
      %v862 = vadd.f32 %v861, %v859
      %v863 = vadd.f32 %v862, %v860
      %v864 = vrot.slane %v863, 4
      %v865 = vadd.f32 %v863, %v864
      %v866 = vrot.slane %v865, 2
      %v867 = vadd.f32 %v865, %v866
      %v868 = vrot.slane %v867, 1
      %v869 = vadd.f32 %v867, %v868
      %vm870 = vcmask 1040384
      %v871 = vsel %vm870, %v856, %v869
      %vm872 = vcmask 1041408
      %v873 = vsel %vm872, %v871, 0.0
      %874 = vst [vmem:[%s239] sm:$0xff] %v873
      %s875 = smul.u32 4, %s21
      %p876 = scmp.lt.s32.totalorder %s20, 1
      %s877 = scalar_select %p876, %s20, 1
      %p878 = scmp.lt.s32.totalorder %s875, 3
      %s879 = scalar_select %p878, %s875, 3
      %s880 = smul.addr %s877, 4
      %s881 = sadd.s32 %s879, %s880
      %s882 = smul.addr %s881, 8
      %s883 = scalar_lea.vmem %s3, %s882
      %p884 = scmp.lt.s32.totalorder %s20, 1
      %s885 = scalar_select %p884, %s20, 1
      %p886 = scmp.lt.s32.totalorder %s21, 0
      %s887 = scalar_select %p886, %s21, 0
      %s888 = sadd.s32 %s887, %s885
      %s889 = smul.addr %s888, 8
      %s890 = scalar_lea.vmem %s4, %s889
      // Predicated region
      $region33: #{tdnn_forward.2} parent=31 // pred_check
        %p891 = pneg %p116
      $region34: #{tdnn_forward.2} parent=31 // pred_check_branch
        %893 = sbr.rel (%p891) target = $region36
      $region35: #{tdnn_forward.2} parent=31 // pred_region
        %s894 = smul.u32 4, %s21
      $region36: #{tdnn_forward.2} parent=31 // pred_fallthru
        _
      // Predicated region
      $region37: #{tdnn_forward.2} parent=31 // pred_check
        %p895 = pneg %p144
      $region38: #{tdnn_forward.2} parent=31 // pred_check_branch
        %897 = sbr.rel (%p895) target = $region40
      $region39: #{tdnn_forward.2} parent=31 // pred_region
        _
      $region40: #{tdnn_forward.2} parent=31 // pred_fallthru
        _
    $region32: #{tdnn_forward.2} parent=5 // pred_fallthru
      _
    %p898 = scmp.le.s32.totalorder 2, %s11
    // Predicated region
    $region41: #{tdnn_forward.2} parent=5 // pred_check
      %p899 = pneg %p898
    $region42: #{tdnn_forward.2} parent=5 // pred_check_branch
      %901 = sbr.rel (%p899) target = $region44
    $region43: #{tdnn_forward.2} parent=5 // pred_region
      %s902 = ssub.s32 %s11, 2
      // Predicated region
      $region45: #{tdnn_forward.2} parent=43 // pred_check
        %p903 = pneg %p122
      $region46: #{tdnn_forward.2} parent=43 // pred_check_branch
        %905 = sbr.rel (%p903) target = $region48
      $region47: #{tdnn_forward.2} parent=43 // pred_region
        %s906 = smul.u32 4, %s23
        %p907 = scmp.lt.s32.totalorder %s22, 1
        %s908 = scalar_select %p907, %s22, 1
        %p909 = scmp.lt.s32.totalorder %s906, 3
        %s910 = scalar_select %p909, %s906, 3
        %s911 = smul.addr %s908, 4
        %s912 = sadd.s32 %s910, %s911
        %s913 = smul.addr %s912, 8
        %s914 = scalar_lea.vmem %s3, %s913
      $region48: #{tdnn_forward.2} parent=43 // pred_fallthru
        _
      // Predicated region
      $region49: #{tdnn_forward.2} parent=43 // pred_check
        %p915 = pneg %p150
      $region50: #{tdnn_forward.2} parent=43 // pred_check_branch
        %917 = sbr.rel (%p915) target = $region52
      $region51: #{tdnn_forward.2} parent=43 // pred_region
        %p918 = scmp.lt.s32.totalorder %s22, 1
        %s919 = scalar_select %p918, %s22, 1
        %p920 = scmp.lt.s32.totalorder %s23, 0
        %s921 = scalar_select %p920, %s23, 0
        %s922 = sadd.s32 %s921, %s919
        %s923 = smul.addr %s922, 8
        %s924 = scalar_lea.vmem %s4, %s923
      $region52: #{tdnn_forward.2} parent=43 // pred_fallthru
        _
    $region44: #{tdnn_forward.2} parent=5 // pred_fallthru
      _
  $region6: #{tdnn_forward.2} parent=0 // loop_footer
    %s15 = sadd.s32 1, %s11
  $region7: #{tdnn_forward.2} parent=0 // loop_footer_branch
    %10 = sbr.rel target = $region3
  $region8: #{tdnn_forward.2} parent=0 // loop_exit
    _

</llo_original>
